<compile_context>
chip_gen: v5e
topology: v5e:2x2
jax: 0.10.0
libtpu: 0.0.40
codegen_flags: <defaults>
</compile_context>

<pallas_src>
import functools

import jax
import jax.numpy as jnp
from jax.experimental import pallas as pl
from jax.experimental.pallas import tpu as pltpu


# Per-band 2x2 output-placement signs (module registers ll, -lh, -hl, hh).
_BAND_SIGNS = (
    ((1.0, 1.0), (1.0, 1.0)),      # ll
    ((1.0, 1.0), (-1.0, -1.0)),    # lh
    ((1.0, -1.0), (1.0, -1.0)),    # hl
    ((1.0, -1.0), (-1.0, 1.0)),    # hh
)


def _fold_factor(w, rows):
    """Lane-fold factor k: pack k input rows into the 128-lane dimension."""
    if w >= 128 or 128 % w != 0:
        return 1
    k = 128 // w                     # power of two
    while k > 1 and rows % k:
        k //= 2
    return k


def _band_matrices(w, k, dtype):
    """(4, k*W, 4*k*W) block-diagonal expansion matrices, one per band.

    Input lane p = j*W + t (sub-row j, column t) maps, inside diagonal block j,
    to output lanes j*4W + {2t, 2t+1} (output row 2i) and j*4W + 2W + {2t, 2t+1}
    (output row 2i+1), weighted 0.5 * band sign.
    """
    wf = k * w
    p = jnp.arange(wf)
    q = jnp.arange(4 * wf)
    j_in, t = p // w, p % w
    j_out, r = q // (4 * w), q % (4 * w)
    out_row_par = r // (2 * w)            # 0 -> output row 2i, 1 -> 2i+1
    out_col = r % (2 * w)
    out_col_par = out_col % 2             # 0 -> output col 2j, 1 -> 2j+1
    src_col = out_col // 2                # input column feeding this output col
    hit = (j_in[:, None] == j_out[None, :]) & (t[:, None] == src_col[None, :])
    signs = jnp.asarray(_BAND_SIGNS, jnp.float32)            # (4, 2, 2)
    coef = 0.5 * signs[:, out_row_par, out_col_par]           # (4, 4*wf)
    mats = jnp.where(hit[None], coef[:, None, :], 0.0)        # (4, wf, 4*wf)
    return mats.astype(dtype)


def _divisors(x):
    return [d for d in range(1, x + 1) if x % d == 0]


def _pick_tiling(n, r_f, w_f, itemsize, target_in_bytes, nb_cap=16):
    """Pick (batch block nb, folded-row block rb) for grid (n//nb, r_f//rb)."""
    row_bytes = 4 * w_f * itemsize                       # one folded row, 4 bands
    legal_rb = [d for d in _divisors(r_f) if d % 8 == 0 or d == r_f]
    fitting = [d for d in legal_rb if d * row_bytes <= target_in_bytes]
    rb = max(fitting) if fitting else min(legal_rb)
    nb = 1
    if rb == r_f and n > 1:
        nb_opts = [d for d in _divisors(n)
                   if d <= nb_cap and d * rb * row_bytes <= target_in_bytes]
        if nb_opts:
            nb = max(nb_opts)
    # v7x shards 'parallel' grid axes over its 2 TensorCores: keep >= 2 steps.
    if (n // nb) * (r_f // rb) < 2:
        if nb > 1:
            nb = max(d for d in _divisors(n) if d < nb)
        else:
            smaller = [d for d in legal_rb if d < rb]
            if smaller:
                rb = max(smaller)
    return nb, rb


def _inv_haar_kernel(x_ref, m_ref, o_ref, *, nb):
    # x_ref: (nb, 4, rb, Wf)  bands [ll, lh, hl, hh]
    # m_ref: (4, Wf, 4*Wf)    per-band expansion matrices (0.5 folded in)
    # o_ref: (nb, rb, 4*Wf)   == (N, C, 2H, 2W) viewed row-major
    m_ll, m_lh, m_hl, m_hh = m_ref[0], m_ref[1], m_ref[2], m_ref[3]
    for b in range(nb):                      # static unroll; nb is capped small
        acc = jnp.dot(x_ref[b, 0], m_ll, preferred_element_type=jnp.float32)
        acc = acc + jnp.dot(x_ref[b, 1], m_lh, preferred_element_type=jnp.float32)
        acc = acc + jnp.dot(x_ref[b, 2], m_hl, preferred_element_type=jnp.float32)
        acc = acc + jnp.dot(x_ref[b, 3], m_hh, preferred_element_type=jnp.float32)
        o_ref[b] = acc.astype(o_ref.dtype)   # single full-lane-width store


@jax.jit
def inverse_haar_transform(img):
    """(N, 4C, H, W) [ll|lh|hl|hh] -> (N, C, 2H, 2W); matches the PyTorch module."""
    n, c4, h, w = img.shape
    assert c4 % 4 == 0, "channel dim must hold the 4 wavelet bands"
    c = c4 // 4
    dtype = img.dtype
    itemsize = dtype.itemsize

    rows = c * h
    k = _fold_factor(w, rows)
    r_f, w_f = rows // k, k * w

    mats = _band_matrices(w, k, dtype)                    # (4, Wf, 4*Wf)
    mat_bytes = 4 * w_f * 4 * w_f * itemsize

    # ~8 MiB of input per grid step (amortizes the ~0.35us step overhead and
    # reaches the HBM roofline); shrink if the expansion matrices are large.
    budget = (40 << 20) - 2 * mat_bytes
    target_in = max(256 << 10, min(8 << 20, budget // 4))

    nb, rb = _pick_tiling(n, r_f, w_f, itemsize, target_in)

    in_tile = nb * 4 * rb * w_f * itemsize                # == output tile bytes
    # Resident ~= double-buffered in + out tiles + (once-fetched) matrices.
    vmem_limit = int(min(64 << 20,
                         max(32 << 20, 4 * in_tile + 2 * mat_bytes + (8 << 20))))

    # Free reshapes: (N, 4C, H, W) -> (N, 4, C*H, W) -> (N, 4, C*H//k, k*W).
    x = img.reshape(n, 4, r_f, w_f)

    out_flat = pl.pallas_call(
        functools.partial(_inv_haar_kernel, nb=nb),
        out_shape=jax.ShapeDtypeStruct((n, r_f, 4 * w_f), dtype),
        grid=(n // nb, r_f // rb),
        in_specs=[
            pl.BlockSpec((nb, 4, rb, w_f), lambda i, j: (i, 0, j, 0)),
            pl.BlockSpec((4, w_f, 4 * w_f), lambda i, j: (0, 0, 0)),
        ],
        out_specs=pl.BlockSpec((nb, rb, 4 * w_f), lambda i, j: (i, j, 0)),
        compiler_params=pltpu.CompilerParams(
            dimension_semantics=("parallel", "parallel"),
            vmem_limit_bytes=vmem_limit),
    )(x, mats)

    # Free reshape back to NCHW.
    return out_flat.reshape(n, c, 2 * h, 2 * w)


def inverse_haar_reference(img):
    """Plain-JAX reference mirroring PyTorch InverseHaarTransform.forward."""
    n, c4, h, w = img.shape
    c = c4 // 4
    ll, lh, hl, hh = jnp.split(img, 4, axis=1)
    s00 = 0.5 * (ll + lh + hl + hh)
    s01 = 0.5 * (ll + lh - hl - hh)
    s10 = 0.5 * (ll - lh + hl - hh)
    s11 = 0.5 * (ll - lh - hl + hh)
    out = jnp.zeros((n, c, 2 * h, 2 * w), img.dtype)
    out = out.at[:, :, 0::2, 0::2].set(s00)
    out = out.at[:, :, 0::2, 1::2].set(s01)
    out = out.at[:, :, 1::2, 0::2].set(s10)
    out = out.at[:, :, 1::2, 1::2].set(s11)
    return out


if __name__ == "__main__":
    key = jax.random.PRNGKey(0)

    # Primary shape: (N, 4*C, H, W) = (2, 16, 16, 16) -> output (2, 4, 32, 32).
    x = jax.random.normal(key, (2, 16, 16, 16), dtype=jnp.float32)
    out = jax.block_until_ready(inverse_haar_transform(x))
    ref = inverse_haar_reference(x)
    assert out.shape == (2, 4, 32, 32), out.shape
    assert jnp.allclose(out, ref, atol=1e-5, rtol=1e-5), "mismatch vs reference (1)"

    # Second shape: C=3, odd batch, different lane-fold factor.
    y = jax.random.normal(jax.random.PRNGKey(0), (3, 12, 8, 8), dtype=jnp.float32)
    out2 = jax.block_until_ready(inverse_haar_transform(y))
    ref2 = inverse_haar_reference(y)
    assert out2.shape == (3, 3, 16, 16), out2.shape
    assert jnp.allclose(out2, ref2, atol=1e-5, rtol=1e-5), "mismatch vs reference (2)"

    print("KERNEL_OK")
</pallas_src>

<mosaic_0001>
module attributes {stable_mosaic.version = 11 : i64} {
  func.func @_inv_haar_kernel(%arg0: i32, %arg1: i32, %arg2: memref<1x4x8x128xf32, #tpu.memory_space<vmem>>, %arg3: memref<4x128x512xf32, #tpu.memory_space<vmem>>, %arg4: memref<1x8x512xf32, #tpu.memory_space<vmem>>) attributes {dimension_semantics = [#tpu.dimension_semantics<parallel>, #tpu.dimension_semantics<parallel>], iteration_bounds = array<i64: 2, 1>, scalar_prefetch = 0 : i64, scratch_operands = 0 : i64, tpu.core_type = #tpu.core_type<tc>, window_params = [{transform_indices = @transform_0, window_bounds = array<i64: 1, 4, 8, 128>}, {pipeline_mode = #tpu.pipeline_mode<synchronous>, transform_indices = @transform_1, window_bounds = array<i64: 4, 128, 512>}, {transform_indices = @transform_2, window_bounds = array<i64: 1, 8, 512>}]} {
    %c0 = arith.constant 0 : index
    %c0_0 = arith.constant 0 : index
    %c0_1 = arith.constant 0 : index
    %0 = vector.load %arg3[%c0, %c0_0, %c0_1] : memref<4x128x512xf32, #tpu.memory_space<vmem>>, vector<1x128x512xf32>
    %1 = vector.shape_cast %0 : vector<1x128x512xf32> to vector<128x512xf32>
    %c1 = arith.constant 1 : index
    %c0_2 = arith.constant 0 : index
    %c0_3 = arith.constant 0 : index
    %2 = vector.load %arg3[%c1, %c0_2, %c0_3] : memref<4x128x512xf32, #tpu.memory_space<vmem>>, vector<1x128x512xf32>
    %3 = vector.shape_cast %2 : vector<1x128x512xf32> to vector<128x512xf32>
    %c2 = arith.constant 2 : index
    %c0_4 = arith.constant 0 : index
    %c0_5 = arith.constant 0 : index
    %4 = vector.load %arg3[%c2, %c0_4, %c0_5] : memref<4x128x512xf32, #tpu.memory_space<vmem>>, vector<1x128x512xf32>
    %5 = vector.shape_cast %4 : vector<1x128x512xf32> to vector<128x512xf32>
    %c3 = arith.constant 3 : index
    %c0_6 = arith.constant 0 : index
    %c0_7 = arith.constant 0 : index
    %6 = vector.load %arg3[%c3, %c0_6, %c0_7] : memref<4x128x512xf32, #tpu.memory_space<vmem>>, vector<1x128x512xf32>
    %7 = vector.shape_cast %6 : vector<1x128x512xf32> to vector<128x512xf32>
    %c0_8 = arith.constant 0 : index
    %c0_9 = arith.constant 0 : index
    %c0_10 = arith.constant 0 : index
    %c0_11 = arith.constant 0 : index
    %8 = vector.load %arg2[%c0_8, %c0_9, %c0_10, %c0_11] : memref<1x4x8x128xf32, #tpu.memory_space<vmem>>, vector<1x1x8x128xf32>
    %9 = vector.shape_cast %8 : vector<1x1x8x128xf32> to vector<8x128xf32>
    %cst = arith.constant dense<0.000000e+00> : vector<8x512xf32>
    %10 = tpu.matmul %9, %1, %cst {dimension_numbers = #tpu.dot_dimension_numbers<[1], [0], [0], [1], [0, 0, 1, 1], [], []>} : vector<8x128xf32>, vector<128x512xf32>, vector<8x512xf32> -> vector<8x512xf32>
    %c0_12 = arith.constant 0 : index
    %c1_13 = arith.constant 1 : index
    %c0_14 = arith.constant 0 : index
    %c0_15 = arith.constant 0 : index
    %11 = vector.load %arg2[%c0_12, %c1_13, %c0_14, %c0_15] : memref<1x4x8x128xf32, #tpu.memory_space<vmem>>, vector<1x1x8x128xf32>
    %12 = vector.shape_cast %11 : vector<1x1x8x128xf32> to vector<8x128xf32>
    %cst_16 = arith.constant dense<0.000000e+00> : vector<8x512xf32>
    %13 = tpu.matmul %12, %3, %cst_16 {dimension_numbers = #tpu.dot_dimension_numbers<[1], [0], [0], [1], [0, 0, 1, 1], [], []>} : vector<8x128xf32>, vector<128x512xf32>, vector<8x512xf32> -> vector<8x512xf32>
    %14 = arith.addf %10, %13 : vector<8x512xf32>
    %c0_17 = arith.constant 0 : index
    %c2_18 = arith.constant 2 : index
    %c0_19 = arith.constant 0 : index
    %c0_20 = arith.constant 0 : index
    %15 = vector.load %arg2[%c0_17, %c2_18, %c0_19, %c0_20] : memref<1x4x8x128xf32, #tpu.memory_space<vmem>>, vector<1x1x8x128xf32>
    %16 = vector.shape_cast %15 : vector<1x1x8x128xf32> to vector<8x128xf32>
    %cst_21 = arith.constant dense<0.000000e+00> : vector<8x512xf32>
    %17 = tpu.matmul %16, %5, %cst_21 {dimension_numbers = #tpu.dot_dimension_numbers<[1], [0], [0], [1], [0, 0, 1, 1], [], []>} : vector<8x128xf32>, vector<128x512xf32>, vector<8x512xf32> -> vector<8x512xf32>
    %18 = arith.addf %14, %17 : vector<8x512xf32>
    %c0_22 = arith.constant 0 : index
    %c3_23 = arith.constant 3 : index
    %c0_24 = arith.constant 0 : index
    %c0_25 = arith.constant 0 : index
    %19 = vector.load %arg2[%c0_22, %c3_23, %c0_24, %c0_25] : memref<1x4x8x128xf32, #tpu.memory_space<vmem>>, vector<1x1x8x128xf32>
    %20 = vector.shape_cast %19 : vector<1x1x8x128xf32> to vector<8x128xf32>
    %cst_26 = arith.constant dense<0.000000e+00> : vector<8x512xf32>
    %21 = tpu.matmul %20, %7, %cst_26 {dimension_numbers = #tpu.dot_dimension_numbers<[1], [0], [0], [1], [0, 0, 1, 1], [], []>} : vector<8x128xf32>, vector<128x512xf32>, vector<8x512xf32> -> vector<8x512xf32>
    %22 = arith.addf %18, %21 : vector<8x512xf32>
    %c0_27 = arith.constant 0 : index
    %c0_28 = arith.constant 0 : index
    %c0_29 = arith.constant 0 : index
    %23 = vector.load %arg4[%c0_27, %c0_28, %c0_29] : memref<1x8x512xf32, #tpu.memory_space<vmem>>, vector<1x8x512xf32>
    %24 = vector.shape_cast %23 : vector<1x8x512xf32> to vector<8x512xf32>
    %25 = vector.shape_cast %22 : vector<8x512xf32> to vector<1x8x512xf32>
    tpu.vector_store %arg4[%c0_27, %c0_28, %c0_29], %25 {strides = array<i32>} : memref<1x8x512xf32, #tpu.memory_space<vmem>>, vector<1x8x512xf32>,
    return
  }
  func.func @transform_0(%arg0: i32, %arg1: i32) -> (i32, i32, i32, i32) {
    %c0_i32 = arith.constant 0 : i32
    %c0_i32_0 = arith.constant 0 : i32
    %c0_i32_1 = arith.constant 0 : i32
    return %arg0, %c0_i32, %arg1, %c0_i32_0 : i32, i32, i32, i32
  }
  func.func @transform_1(%arg0: i32, %arg1: i32) -> (i32, i32, i32) {
    %c0_i32 = arith.constant 0 : i32
    %c0_i32_0 = arith.constant 0 : i32
    %c0_i32_1 = arith.constant 0 : i32
    %c0_i32_2 = arith.constant 0 : i32
    return %c0_i32, %c0_i32_0, %c0_i32_1 : i32, i32, i32
  }
  func.func @transform_2(%arg0: i32, %arg1: i32) -> (i32, i32, i32) {
    %c0_i32 = arith.constant 0 : i32
    %c0_i32_0 = arith.constant 0 : i32
    return %arg0, %arg1, %c0_i32 : i32, i32, i32
  }
}

</mosaic_0001>

<llo_original>
// kernel: inverse_haar_transform.1
$region0: #{inverse_haar_transform.1}
  #allocation0 [shape = 'u32[]', space=smem, size = 0x4, offset = 0x4, fixed_abs, tag = 'smem constant byte address 0x4 - core index']
  #allocation1 [shape = 'u32[72,128]{1,0:T(1,128)}', space=vmem, size = 0x9000, scoped, tag = 'internal scratch']
  %s0 = inlined_call_operand.vmem [shape: f32[2,4,8,128], index: 0, kind: input, shape index: {}]
  %s1 = inlined_call_operand.vmem [shape: f32[4,128,512], index: 1, kind: input, shape index: {}]
  %s2 = inlined_call_operand.vmem [shape: f32[2,8,512], index: 2, kind: output, shape index: {}]
  %s3 = sld [smem:[#allocation0]]
  $region41: #{inverse_haar_transform.1} parent=0
    _
  %s5 = ssub.s32 1, %s3
  %s6 = scalar_select 0, %s5, %s3
  loop: start=0, step=1, limit=4
  $region2: #{inverse_haar_transform.1} parent=0 // loop_pre_header
    _
  $region3: #{inverse_haar_transform.1} parent=0 // loop_header
    %s8 = sphi 0, %s12
    %p9 = scmp.ge.s32.totalorder %s8, 4
    %s15 = sphi 0, %s27
    %s16 = sphi 0, %s23
    %s17 = sphi 0, %s15
    %s18 = sphi 0, %s16
    %s19 = sphi 0, %s17
    %s20 = sphi 0, %s18
    %s32 = sphi 0, %s34
    %s35 = sphi 0, %s32
    %s36 = sphi 0, %s35
    %s52 = sphi 0, %s36
    %s56 = sphi 0, %s56
    %s58 = sphi 0, %s56
    %s59 = sphi 0, %s58
    %s73 = sphi 0, %s59
    %s81 = sphi 0, %s83
    %s84 = sphi 0, %s81
    %s85 = sphi 0, %s84
    %s101 = sphi 0, %s85
  $region4: #{inverse_haar_transform.1} parent=0 // loop_header_branch
    %11 = sbr.rel (%p9) target = $region8
  $region5: #{inverse_haar_transform.1} parent=0 // loop_body
    %s13 = ssub.s32 %s8, 1
    %s14 = ssub.s32 %s8, 2
    %s21 = sadd.s32 1, %s16
    %p22 = scmp.ge.s32.totalorder %s21, 1
    %s23 = scalar_select %p22, 0, %s21
    %s24 = sadd.s32 1, %s15
    %s25 = scalar_select %p22, %s24, %s15
    %p26 = scmp.ge.s32.totalorder %s25, 2
    %s27 = scalar_select %p26, 0, %s25
    %s28 = ssub.s32 %s15, %s27
    %s29 = ssub.s32 %s16, %s23
    %s30 = sor.u32 %s28, %s29
    %p31 = scmp.eq.s32.totalorder %s30, 0
    %s33 = sadd.s32 %s32, 1
    %s34 = scalar_select %p31, %s32, %s33
    %p37 = pneg %p31
    %p38 = scmp.eq.s32.totalorder %s8, 1
    %p39 = por %p37, %p38
    %p40 = scmp.ne.s32.totalorder %s32, %s35
    %p41 = scmp.eq.s32.totalorder %s8, 0
    %p42 = por %p40, %p41
    %p43 = scmp.ne.s32.totalorder %s32, %s35
    %p44 = scmp.eq.s32.totalorder %s13, 1
    %p45 = por %p43, %p44
    %p46 = scmp.ne.s32.totalorder %s35, %s36
    %p47 = scmp.eq.s32.totalorder %s13, 0
    %p48 = por %p46, %p47
    %p49 = scmp.ne.s32.totalorder %s35, %s36
    %p50 = scmp.eq.s32.totalorder %s14, 1
    %p51 = por %p49, %p50
    %p53 = scmp.ne.s32.totalorder %s36, %s52
    %p54 = scmp.eq.s32.totalorder %s14, 0
    %p55 = por %p53, %p54
    %s57 = sadd.s32 %s56, 1
    %p60 = scmp.eq.s32.totalorder %s8, 1
    %p61 = scmp.ne.s32.totalorder %s56, %s58
    %p62 = scmp.eq.s32.totalorder %s8, 0
    %p63 = por %p61, %p62
    %p64 = scmp.ne.s32.totalorder %s56, %s58
    %p65 = scmp.eq.s32.totalorder %s13, 1
    %p66 = por %p64, %p65
    %p67 = scmp.ne.s32.totalorder %s58, %s59
    %p68 = scmp.eq.s32.totalorder %s13, 0
    %p69 = por %p67, %p68
    %p70 = scmp.ne.s32.totalorder %s58, %s59
    %p71 = scmp.eq.s32.totalorder %s14, 1
    %p72 = por %p70, %p71
    %p74 = scmp.ne.s32.totalorder %s59, %s73
    %p75 = scmp.eq.s32.totalorder %s14, 0
    %p76 = por %p74, %p75
    %s77 = ssub.s32 %s15, %s27
    %s78 = ssub.s32 %s16, %s23
    %s79 = sor.u32 %s77, %s78
    %p80 = scmp.eq.s32.totalorder %s79, 0
    %s82 = sadd.s32 %s81, 1
    %s83 = scalar_select %p80, %s81, %s82
    %p86 = pneg %p80
    %p87 = scmp.eq.s32.totalorder %s8, 1
    %p88 = por %p86, %p87
    %p89 = scmp.ne.s32.totalorder %s81, %s84
    %p90 = scmp.eq.s32.totalorder %s8, 0
    %p91 = por %p89, %p90
    %p92 = scmp.ne.s32.totalorder %s81, %s84
    %p93 = scmp.eq.s32.totalorder %s13, 1
    %p94 = por %p92, %p93
    %p95 = scmp.ne.s32.totalorder %s84, %s85
    %p96 = scmp.eq.s32.totalorder %s13, 0
    %p97 = por %p95, %p96
    %p98 = scmp.ne.s32.totalorder %s84, %s85
    %p99 = scmp.eq.s32.totalorder %s14, 1
    %p100 = por %p98, %p99
    %p102 = scmp.ne.s32.totalorder %s85, %s101
    %p103 = scmp.eq.s32.totalorder %s14, 0
    %p104 = por %p102, %p103
    %p105 = scmp.le.s32.totalorder 1, %s8
    %p106 = scmp.lt.s32.totalorder %s8, 3
    %p107 = pnand %p105, %p106
    %p108 = pneg %p107
    // Predicated region
    $region9: #{inverse_haar_transform.1} parent=5 // pred_check
      _
    $region10: #{inverse_haar_transform.1} parent=5 // pred_check_branch
      %110 = sbr.rel (%p107) target = $region12
    $region11: #{inverse_haar_transform.1} parent=5 // pred_region
      %s111 = ssub.s32 %s8, 1
      // Predicated region
      $region13: #{inverse_haar_transform.1} parent=11 // pred_check
        %p112 = pneg %p69
      $region14: #{inverse_haar_transform.1} parent=11 // pred_check_branch
        %114 = sbr.rel (%p112) target = $region16
      $region15: #{inverse_haar_transform.1} parent=11 // pred_region
        _
      $region16: #{inverse_haar_transform.1} parent=11 // pred_fallthru
        _
    $region12: #{inverse_haar_transform.1} parent=5 // pred_fallthru
      _
    %p115 = scmp.lt.s32.totalorder %s8, 2
    // Predicated region
    $region17: #{inverse_haar_transform.1} parent=5 // pred_check
      %p116 = pneg %p115
    $region18: #{inverse_haar_transform.1} parent=5 // pred_check_branch
      %118 = sbr.rel (%p116) target = $region20
    $region19: #{inverse_haar_transform.1} parent=5 // pred_region
      // Predicated region
      $region21: #{inverse_haar_transform.1} parent=19 // pred_check
        %p119 = pneg %p42
      $region22: #{inverse_haar_transform.1} parent=19 // pred_check_branch
        %121 = sbr.rel (%p119) target = $region24
      $region23: #{inverse_haar_transform.1} parent=19 // pred_region
        %p122 = scmp.lt.s32.totalorder %s15, 1
        %s123 = scalar_select %p122, %s15, 1
        %p124 = scmp.lt.s32.totalorder %s16, 0
        %s125 = scalar_select %p124, %s16, 0
        %s126 = smul.addr %s123, 4
        %s127 = sadd.s32 %s125, %s126
        %s128 = smul.addr %s127, 8
        %s129 = scalar_lea.vmem %s0, %s128
      $region24: #{inverse_haar_transform.1} parent=19 // pred_fallthru
        _
    $region20: #{inverse_haar_transform.1} parent=5 // pred_fallthru
      _
    %p130 = scmp.le.s32.totalorder 1, %s8
    %p131 = scmp.lt.s32.totalorder %s8, 3
    %p132 = pnand %p130, %p131
    %p133 = pneg %p132
    // Predicated region
    $region25: #{inverse_haar_transform.1} parent=5 // pred_check
      _
    $region26: #{inverse_haar_transform.1} parent=5 // pred_check_branch
      %135 = sbr.rel (%p132) target = $region28
    $region27: #{inverse_haar_transform.1} parent=5 // pred_region
      %s136 = ssub.s32 %s8, 1
      %p137 = scmp.lt.s32.totalorder %s17, 1
      %s138 = scalar_select %p137, %s17, 1
      %p139 = scmp.lt.s32.totalorder %s18, 0
      %s140 = scalar_select %p139, %s18, 0
      %s141 = smul.addr %s138, 4
      %s142 = sadd.s32 %s140, %s141
      %s143 = smul.addr %s142, 8
      %s144 = scalar_lea.vmem %s0, %s143
      %p145 = pneg %p48
      %p146 = pneg %p45
      %p147 = pneg %p69
      %p148 = pneg %p66
      %p149 = pneg %p97
      %p150 = pneg %p94
      %p151 = scmp.lt.s32.totalorder %s17, 1
      %s152 = scalar_select %p151, %s17, 1
      %p153 = scmp.lt.s32.totalorder %s18, 0
      %s154 = scalar_select %p153, %s18, 0
      %s155 = smul.addr %s154, 4
      %s156 = smul.addr %s152, 4
      %s157 = sadd.s32 %s155, %s156
      %s158 = smul.addr %s157, 8
      %s159 = scalar_lea.vmem %s2, %s158
      %p160 = scmp.lt.s32.totalorder %s17, 1
      %s161 = scalar_select %p160, %s17, 1
      %p162 = scmp.lt.s32.totalorder %s18, 0
      %s163 = scalar_select %p162, %s18, 0
      %s164 = smul.addr %s161, 4
      %s165 = sadd.s32 %s163, %s164
      %s166 = smul.addr %s165, 8
      %s167 = scalar_lea.vmem %s0, %s166
      %p168 = scmp.lt.s32.totalorder %s17, 1
      %s169 = scalar_select %p168, %s17, 1
      %p170 = scmp.lt.s32.totalorder %s18, 0
      %s171 = scalar_select %p170, %s18, 0
      %s172 = smul.addr %s171, 4
      %s173 = smul.addr %s169, 4
      %s174 = sadd.s32 %s172, %s173
      %s175 = smul.addr %s174, 8
      %s176 = scalar_lea.vmem %s2, %s175
      %v177 = vld [vmem:[%s1] sm:$0xff]
      %v178 = vld [vmem:[%s1 + $0x8] sm:$0xff]
      %v179 = vld [vmem:[%s1 + $0x10] sm:$0xff]
      %v180 = vld [vmem:[%s1 + $0x18] sm:$0xff]
      %v181 = vld [vmem:[%s1 + $0x20] sm:$0xff]
      %v182 = vld [vmem:[%s1 + $0x28] sm:$0xff]
      %v183 = vld [vmem:[%s1 + $0x30] sm:$0xff]
      %v184 = vld [vmem:[%s1 + $0x38] sm:$0xff]
      %v185 = vld [vmem:[%s1 + $0x40] sm:$0xff]
      %v186 = vld [vmem:[%s1 + $0x48] sm:$0xff]
      %v187 = vld [vmem:[%s1 + $0x50] sm:$0xff]
      %v188 = vld [vmem:[%s1 + $0x58] sm:$0xff]
      %v189 = vld [vmem:[%s1 + $0x60] sm:$0xff]
      %v190 = vld [vmem:[%s1 + $0x68] sm:$0xff]
      %v191 = vld [vmem:[%s1 + $0x70] sm:$0xff]
      %v192 = vld [vmem:[%s1 + $0x78] sm:$0xff]
      %v193 = vld [vmem:[%s1 + $0x80] sm:$0xff]
      %v194 = vld [vmem:[%s1 + $0x88] sm:$0xff]
      %v195 = vld [vmem:[%s1 + $0x90] sm:$0xff]
      %v196 = vld [vmem:[%s1 + $0x98] sm:$0xff]
      %v197 = vld [vmem:[%s1 + $0xa0] sm:$0xff]
      %v198 = vld [vmem:[%s1 + $0xa8] sm:$0xff]
      %v199 = vld [vmem:[%s1 + $0xb0] sm:$0xff]
      %v200 = vld [vmem:[%s1 + $0xb8] sm:$0xff]
      %v201 = vld [vmem:[%s1 + $0xc0] sm:$0xff]
      %v202 = vld [vmem:[%s1 + $0xc8] sm:$0xff]
      %v203 = vld [vmem:[%s1 + $0xd0] sm:$0xff]
      %v204 = vld [vmem:[%s1 + $0xd8] sm:$0xff]
      %v205 = vld [vmem:[%s1 + $0xe0] sm:$0xff]
      %v206 = vld [vmem:[%s1 + $0xe8] sm:$0xff]
      %v207 = vld [vmem:[%s1 + $0xf0] sm:$0xff]
      %v208 = vld [vmem:[%s1 + $0xf8] sm:$0xff]
      %v209 = vld [vmem:[%s1 + $0x100] sm:$0xff]
      %v210 = vld [vmem:[%s1 + $0x108] sm:$0xff]
      %v211 = vld [vmem:[%s1 + $0x110] sm:$0xff]
      %v212 = vld [vmem:[%s1 + $0x118] sm:$0xff]
      %v213 = vld [vmem:[%s1 + $0x120] sm:$0xff]
      %v214 = vld [vmem:[%s1 + $0x128] sm:$0xff]
      %v215 = vld [vmem:[%s1 + $0x130] sm:$0xff]
      %v216 = vld [vmem:[%s1 + $0x138] sm:$0xff]
      %v217 = vld [vmem:[%s1 + $0x140] sm:$0xff]
      %v218 = vld [vmem:[%s1 + $0x148] sm:$0xff]
      %v219 = vld [vmem:[%s1 + $0x150] sm:$0xff]
      %v220 = vld [vmem:[%s1 + $0x158] sm:$0xff]
      %v221 = vld [vmem:[%s1 + $0x160] sm:$0xff]
      %v222 = vld [vmem:[%s1 + $0x168] sm:$0xff]
      %v223 = vld [vmem:[%s1 + $0x170] sm:$0xff]
      %v224 = vld [vmem:[%s1 + $0x178] sm:$0xff]
      %v225 = vld [vmem:[%s1 + $0x180] sm:$0xff]
      %v226 = vld [vmem:[%s1 + $0x188] sm:$0xff]
      %v227 = vld [vmem:[%s1 + $0x190] sm:$0xff]
      %v228 = vld [vmem:[%s1 + $0x198] sm:$0xff]
      %v229 = vld [vmem:[%s1 + $0x1a0] sm:$0xff]
      %v230 = vld [vmem:[%s1 + $0x1a8] sm:$0xff]
      %v231 = vld [vmem:[%s1 + $0x1b0] sm:$0xff]
      %v232 = vld [vmem:[%s1 + $0x1b8] sm:$0xff]
      %v233 = vld [vmem:[%s1 + $0x1c0] sm:$0xff]
      %v234 = vld [vmem:[%s1 + $0x1c8] sm:$0xff]
      %v235 = vld [vmem:[%s1 + $0x1d0] sm:$0xff]
      %v236 = vld [vmem:[%s1 + $0x1d8] sm:$0xff]
      %v237 = vld [vmem:[%s1 + $0x1e0] sm:$0xff]
      %v238 = vld [vmem:[%s1 + $0x1e8] sm:$0xff]
      %v239 = vld [vmem:[%s1 + $0x1f0] sm:$0xff]
      %v240 = vld [vmem:[%s1 + $0x1f8] sm:$0xff]
      %s241 = scalar_lea.vmem %s1, 512
      %v242 = vld [vmem:[%s241] sm:$0xff]
      %v243 = vld [vmem:[%s241 + $0x8] sm:$0xff]
      %v244 = vld [vmem:[%s241 + $0x10] sm:$0xff]
      %v245 = vld [vmem:[%s241 + $0x18] sm:$0xff]
      %v246 = vld [vmem:[%s241 + $0x20] sm:$0xff]
      %v247 = vld [vmem:[%s241 + $0x28] sm:$0xff]
      %v248 = vld [vmem:[%s241 + $0x30] sm:$0xff]
      %v249 = vld [vmem:[%s241 + $0x38] sm:$0xff]
      %v250 = vld [vmem:[%s241 + $0x40] sm:$0xff]
      %v251 = vld [vmem:[%s241 + $0x48] sm:$0xff]
      %v252 = vld [vmem:[%s241 + $0x50] sm:$0xff]
      %v253 = vld [vmem:[%s241 + $0x58] sm:$0xff]
      %v254 = vld [vmem:[%s241 + $0x60] sm:$0xff]
      %v255 = vld [vmem:[%s241 + $0x68] sm:$0xff]
      %v256 = vld [vmem:[%s241 + $0x70] sm:$0xff]
      %v257 = vld [vmem:[%s241 + $0x78] sm:$0xff]
      %v258 = vld [vmem:[%s241 + $0x80] sm:$0xff]
      %v259 = vld [vmem:[%s241 + $0x88] sm:$0xff]
      %v260 = vld [vmem:[%s241 + $0x90] sm:$0xff]
      %v261 = vld [vmem:[%s241 + $0x98] sm:$0xff]
      %v262 = vld [vmem:[%s241 + $0xa0] sm:$0xff]
      %v263 = vld [vmem:[%s241 + $0xa8] sm:$0xff]
      %v264 = vld [vmem:[%s241 + $0xb0] sm:$0xff]
      %v265 = vld [vmem:[%s241 + $0xb8] sm:$0xff]
      %v266 = vld [vmem:[%s241 + $0xc0] sm:$0xff]
      %v267 = vld [vmem:[%s241 + $0xc8] sm:$0xff]
      %v268 = vld [vmem:[%s241 + $0xd0] sm:$0xff]
      %v269 = vld [vmem:[%s241 + $0xd8] sm:$0xff]
      %v270 = vld [vmem:[%s241 + $0xe0] sm:$0xff]
      %v271 = vld [vmem:[%s241 + $0xe8] sm:$0xff]
      %v272 = vld [vmem:[%s241 + $0xf0] sm:$0xff]
      %v273 = vld [vmem:[%s241 + $0xf8] sm:$0xff]
      %v274 = vld [vmem:[%s241 + $0x100] sm:$0xff]
      %v275 = vld [vmem:[%s241 + $0x108] sm:$0xff]
      %v276 = vld [vmem:[%s241 + $0x110] sm:$0xff]
      %v277 = vld [vmem:[%s241 + $0x118] sm:$0xff]
      %v278 = vld [vmem:[%s241 + $0x120] sm:$0xff]
      %v279 = vld [vmem:[%s241 + $0x128] sm:$0xff]
      %v280 = vld [vmem:[%s241 + $0x130] sm:$0xff]
      %v281 = vld [vmem:[%s241 + $0x138] sm:$0xff]
      %v282 = vld [vmem:[%s241 + $0x140] sm:$0xff]
      %v283 = vld [vmem:[%s241 + $0x148] sm:$0xff]
      %v284 = vld [vmem:[%s241 + $0x150] sm:$0xff]
      %v285 = vld [vmem:[%s241 + $0x158] sm:$0xff]
      %v286 = vld [vmem:[%s241 + $0x160] sm:$0xff]
      %v287 = vld [vmem:[%s241 + $0x168] sm:$0xff]
      %v288 = vld [vmem:[%s241 + $0x170] sm:$0xff]
      %v289 = vld [vmem:[%s241 + $0x178] sm:$0xff]
      %v290 = vld [vmem:[%s241 + $0x180] sm:$0xff]
      %v291 = vld [vmem:[%s241 + $0x188] sm:$0xff]
      %v292 = vld [vmem:[%s241 + $0x190] sm:$0xff]
      %v293 = vld [vmem:[%s241 + $0x198] sm:$0xff]
      %v294 = vld [vmem:[%s241 + $0x1a0] sm:$0xff]
      %v295 = vld [vmem:[%s241 + $0x1a8] sm:$0xff]
      %v296 = vld [vmem:[%s241 + $0x1b0] sm:$0xff]
      %v297 = vld [vmem:[%s241 + $0x1b8] sm:$0xff]
      %v298 = vld [vmem:[%s241 + $0x1c0] sm:$0xff]
      %v299 = vld [vmem:[%s241 + $0x1c8] sm:$0xff]
      %v300 = vld [vmem:[%s241 + $0x1d0] sm:$0xff]
      %v301 = vld [vmem:[%s241 + $0x1d8] sm:$0xff]
      %v302 = vld [vmem:[%s241 + $0x1e0] sm:$0xff]
      %v303 = vld [vmem:[%s241 + $0x1e8] sm:$0xff]
      %v304 = vld [vmem:[%s241 + $0x1f0] sm:$0xff]
      %v305 = vld [vmem:[%s241 + $0x1f8] sm:$0xff]
      %s306 = scalar_lea.vmem %s1, 1024
      %v307 = vld [vmem:[%s306] sm:$0xff]
      %v308 = vld [vmem:[%s306 + $0x8] sm:$0xff]
      %v309 = vld [vmem:[%s306 + $0x10] sm:$0xff]
      %v310 = vld [vmem:[%s306 + $0x18] sm:$0xff]
      %v311 = vld [vmem:[%s306 + $0x20] sm:$0xff]
      %v312 = vld [vmem:[%s306 + $0x28] sm:$0xff]
      %v313 = vld [vmem:[%s306 + $0x30] sm:$0xff]
      %v314 = vld [vmem:[%s306 + $0x38] sm:$0xff]
      %v315 = vld [vmem:[%s306 + $0x40] sm:$0xff]
      %v316 = vld [vmem:[%s306 + $0x48] sm:$0xff]
      %v317 = vld [vmem:[%s306 + $0x50] sm:$0xff]
      %v318 = vld [vmem:[%s306 + $0x58] sm:$0xff]
      %v319 = vld [vmem:[%s306 + $0x60] sm:$0xff]
      %v320 = vld [vmem:[%s306 + $0x68] sm:$0xff]
      %v321 = vld [vmem:[%s306 + $0x70] sm:$0xff]
      %v322 = vld [vmem:[%s306 + $0x78] sm:$0xff]
      %v323 = vld [vmem:[%s306 + $0x80] sm:$0xff]
      %v324 = vld [vmem:[%s306 + $0x88] sm:$0xff]
      %v325 = vld [vmem:[%s306 + $0x90] sm:$0xff]
      %v326 = vld [vmem:[%s306 + $0x98] sm:$0xff]
      %v327 = vld [vmem:[%s306 + $0xa0] sm:$0xff]
      %v328 = vld [vmem:[%s306 + $0xa8] sm:$0xff]
      %v329 = vld [vmem:[%s306 + $0xb0] sm:$0xff]
      %v330 = vld [vmem:[%s306 + $0xb8] sm:$0xff]
      %v331 = vld [vmem:[%s306 + $0xc0] sm:$0xff]
      %v332 = vld [vmem:[%s306 + $0xc8] sm:$0xff]
      %v333 = vld [vmem:[%s306 + $0xd0] sm:$0xff]
      %v334 = vld [vmem:[%s306 + $0xd8] sm:$0xff]
      %v335 = vld [vmem:[%s306 + $0xe0] sm:$0xff]
      %v336 = vld [vmem:[%s306 + $0xe8] sm:$0xff]
      %v337 = vld [vmem:[%s306 + $0xf0] sm:$0xff]
      %v338 = vld [vmem:[%s306 + $0xf8] sm:$0xff]
      %v339 = vld [vmem:[%s306 + $0x100] sm:$0xff]
      %v340 = vld [vmem:[%s306 + $0x108] sm:$0xff]
      %v341 = vld [vmem:[%s306 + $0x110] sm:$0xff]
      %v342 = vld [vmem:[%s306 + $0x118] sm:$0xff]
      %v343 = vld [vmem:[%s306 + $0x120] sm:$0xff]
      %v344 = vld [vmem:[%s306 + $0x128] sm:$0xff]
      %v345 = vld [vmem:[%s306 + $0x130] sm:$0xff]
      %v346 = vld [vmem:[%s306 + $0x138] sm:$0xff]
      %v347 = vld [vmem:[%s306 + $0x140] sm:$0xff]
      %v348 = vld [vmem:[%s306 + $0x148] sm:$0xff]
      %v349 = vld [vmem:[%s306 + $0x150] sm:$0xff]
      %v350 = vld [vmem:[%s306 + $0x158] sm:$0xff]
      %v351 = vld [vmem:[%s306 + $0x160] sm:$0xff]
      %v352 = vld [vmem:[%s306 + $0x168] sm:$0xff]
      %v353 = vld [vmem:[%s306 + $0x170] sm:$0xff]
      %v354 = vld [vmem:[%s306 + $0x178] sm:$0xff]
      %v355 = vld [vmem:[%s306 + $0x180] sm:$0xff]
      %v356 = vld [vmem:[%s306 + $0x188] sm:$0xff]
      %v357 = vld [vmem:[%s306 + $0x190] sm:$0xff]
      %v358 = vld [vmem:[%s306 + $0x198] sm:$0xff]
      %v359 = vld [vmem:[%s306 + $0x1a0] sm:$0xff]
      %v360 = vld [vmem:[%s306 + $0x1a8] sm:$0xff]
      %v361 = vld [vmem:[%s306 + $0x1b0] sm:$0xff]
      %v362 = vld [vmem:[%s306 + $0x1b8] sm:$0xff]
      %v363 = vld [vmem:[%s306 + $0x1c0] sm:$0xff]
      %v364 = vld [vmem:[%s306 + $0x1c8] sm:$0xff]
      %v365 = vld [vmem:[%s306 + $0x1d0] sm:$0xff]
      %v366 = vld [vmem:[%s306 + $0x1d8] sm:$0xff]
      %v367 = vld [vmem:[%s306 + $0x1e0] sm:$0xff]
      %v368 = vld [vmem:[%s306 + $0x1e8] sm:$0xff]
      %v369 = vld [vmem:[%s306 + $0x1f0] sm:$0xff]
      %v370 = vld [vmem:[%s306 + $0x1f8] sm:$0xff]
      %s371 = scalar_lea.vmem %s1, 1536
      %v372 = vld [vmem:[%s371] sm:$0xff]
      %v373 = vld [vmem:[%s371 + $0x8] sm:$0xff]
      %v374 = vld [vmem:[%s371 + $0x10] sm:$0xff]
      %v375 = vld [vmem:[%s371 + $0x18] sm:$0xff]
      %v376 = vld [vmem:[%s371 + $0x20] sm:$0xff]
      %v377 = vld [vmem:[%s371 + $0x28] sm:$0xff]
      %v378 = vld [vmem:[%s371 + $0x30] sm:$0xff]
      %v379 = vld [vmem:[%s371 + $0x38] sm:$0xff]
      %v380 = vld [vmem:[%s371 + $0x40] sm:$0xff]
      %v381 = vld [vmem:[%s371 + $0x48] sm:$0xff]
      %v382 = vld [vmem:[%s371 + $0x50] sm:$0xff]
      %v383 = vld [vmem:[%s371 + $0x58] sm:$0xff]
      %v384 = vld [vmem:[%s371 + $0x60] sm:$0xff]
      %v385 = vld [vmem:[%s371 + $0x68] sm:$0xff]
      %v386 = vld [vmem:[%s371 + $0x70] sm:$0xff]
      %v387 = vld [vmem:[%s371 + $0x78] sm:$0xff]
      %v388 = vld [vmem:[%s371 + $0x80] sm:$0xff]
      %v389 = vld [vmem:[%s371 + $0x88] sm:$0xff]
      %v390 = vld [vmem:[%s371 + $0x90] sm:$0xff]
      %v391 = vld [vmem:[%s371 + $0x98] sm:$0xff]
      %v392 = vld [vmem:[%s371 + $0xa0] sm:$0xff]
      %v393 = vld [vmem:[%s371 + $0xa8] sm:$0xff]
      %v394 = vld [vmem:[%s371 + $0xb0] sm:$0xff]
      %v395 = vld [vmem:[%s371 + $0xb8] sm:$0xff]
      %v396 = vld [vmem:[%s371 + $0xc0] sm:$0xff]
      %v397 = vld [vmem:[%s371 + $0xc8] sm:$0xff]
      %v398 = vld [vmem:[%s371 + $0xd0] sm:$0xff]
      %v399 = vld [vmem:[%s371 + $0xd8] sm:$0xff]
      %v400 = vld [vmem:[%s371 + $0xe0] sm:$0xff]
      %v401 = vld [vmem:[%s371 + $0xe8] sm:$0xff]
      %v402 = vld [vmem:[%s371 + $0xf0] sm:$0xff]
      %v403 = vld [vmem:[%s371 + $0xf8] sm:$0xff]
      %v404 = vld [vmem:[%s371 + $0x100] sm:$0xff]
      %v405 = vld [vmem:[%s371 + $0x108] sm:$0xff]
      %v406 = vld [vmem:[%s371 + $0x110] sm:$0xff]
      %v407 = vld [vmem:[%s371 + $0x118] sm:$0xff]
      %v408 = vld [vmem:[%s371 + $0x120] sm:$0xff]
      %v409 = vld [vmem:[%s371 + $0x128] sm:$0xff]
      %v410 = vld [vmem:[%s371 + $0x130] sm:$0xff]
      %v411 = vld [vmem:[%s371 + $0x138] sm:$0xff]
      %v412 = vld [vmem:[%s371 + $0x140] sm:$0xff]
      %v413 = vld [vmem:[%s371 + $0x148] sm:$0xff]
      %v414 = vld [vmem:[%s371 + $0x150] sm:$0xff]
      %v415 = vld [vmem:[%s371 + $0x158] sm:$0xff]
      %v416 = vld [vmem:[%s371 + $0x160] sm:$0xff]
      %v417 = vld [vmem:[%s371 + $0x168] sm:$0xff]
      %v418 = vld [vmem:[%s371 + $0x170] sm:$0xff]
      %v419 = vld [vmem:[%s371 + $0x178] sm:$0xff]
      %v420 = vld [vmem:[%s371 + $0x180] sm:$0xff]
      %v421 = vld [vmem:[%s371 + $0x188] sm:$0xff]
      %v422 = vld [vmem:[%s371 + $0x190] sm:$0xff]
      %v423 = vld [vmem:[%s371 + $0x198] sm:$0xff]
      %v424 = vld [vmem:[%s371 + $0x1a0] sm:$0xff]
      %v425 = vld [vmem:[%s371 + $0x1a8] sm:$0xff]
      %v426 = vld [vmem:[%s371 + $0x1b0] sm:$0xff]
      %v427 = vld [vmem:[%s371 + $0x1b8] sm:$0xff]
      %v428 = vld [vmem:[%s371 + $0x1c0] sm:$0xff]
      %v429 = vld [vmem:[%s371 + $0x1c8] sm:$0xff]
      %v430 = vld [vmem:[%s371 + $0x1d0] sm:$0xff]
      %v431 = vld [vmem:[%s371 + $0x1d8] sm:$0xff]
      %v432 = vld [vmem:[%s371 + $0x1e0] sm:$0xff]
      %v433 = vld [vmem:[%s371 + $0x1e8] sm:$0xff]
      %v434 = vld [vmem:[%s371 + $0x1f0] sm:$0xff]
      %v435 = vld [vmem:[%s371 + $0x1f8] sm:$0xff]
      %v436 = vld [vmem:[%s167] sm:$0xff]
      %s437 = scalar_lea.vmem %s167, 8
      %v438 = vld [vmem:[%s437] sm:$0xff]
      %439 = vmatpush.msra.mxu0 %v302
      %440 = vmatpush.msra.mxu0 %v298
      %441 = vmatpush.msra.mxu0 %v294
      %442 = vmatpush.msra.mxu0 %v290
      %443 = vmatpush.msra.mxu0 %v286
      %444 = vmatpush.msra.mxu0 %v282
      %445 = vmatpush.msra.mxu0 %v278
      %446 = vmatpush.msra.mxu0 %v274
      %447 = vmatpush.msra.mxu0 %v270
      %448 = vmatpush.msra.mxu0 %v266
      %449 = vmatpush.msra.mxu0 %v262
      %450 = vmatpush.msra.mxu0 %v258
      %451 = vmatpush.msra.mxu0 %v254
      %452 = vmatpush.msra.mxu0 %v250
      %453 = vmatpush.msra.mxu0 %v246
      %454 = vmatpush.msra.mxu0 %v242
      %455 = vmatmul.f32.gmra.mxu0 %v438
      %v456 = vpop.f32.mrf.mxu0
      %v457 = vadd.f32 0.0, %v456
      %458 = vdwg.mxu0
      %459 = vmatpush.msra.mxu0 %v303
      %460 = vmatpush.msra.mxu0 %v299
      %461 = vmatpush.msra.mxu0 %v295
      %462 = vmatpush.msra.mxu0 %v291
      %463 = vmatpush.msra.mxu0 %v287
      %464 = vmatpush.msra.mxu0 %v283
      %465 = vmatpush.msra.mxu0 %v279
      %466 = vmatpush.msra.mxu0 %v275
      %467 = vmatpush.msra.mxu0 %v271
      %468 = vmatpush.msra.mxu0 %v267
      %469 = vmatpush.msra.mxu0 %v263
      %470 = vmatpush.msra.mxu0 %v259
      %471 = vmatpush.msra.mxu0 %v255
      %472 = vmatpush.msra.mxu0 %v251
      %473 = vmatpush.msra.mxu0 %v247
      %474 = vmatpush.msra.mxu0 %v243
      %475 = vmatmul.f32.gmra.mxu0 %v438
      %v476 = vpop.f32.mrf.mxu0
      %v477 = vadd.f32 0.0, %v476
      %478 = vdwg.mxu0
      %479 = vmatpush.msra.mxu0 %v304
      %480 = vmatpush.msra.mxu0 %v300
      %481 = vmatpush.msra.mxu0 %v296
      %482 = vmatpush.msra.mxu0 %v292
      %483 = vmatpush.msra.mxu0 %v288
      %484 = vmatpush.msra.mxu0 %v284
      %485 = vmatpush.msra.mxu0 %v280
      %486 = vmatpush.msra.mxu0 %v276
      %487 = vmatpush.msra.mxu0 %v272
      %488 = vmatpush.msra.mxu0 %v268
      %489 = vmatpush.msra.mxu0 %v264
      %490 = vmatpush.msra.mxu0 %v260
      %491 = vmatpush.msra.mxu0 %v256
      %492 = vmatpush.msra.mxu0 %v252
      %493 = vmatpush.msra.mxu0 %v248
      %494 = vmatpush.msra.mxu0 %v244
      %495 = vmatmul.f32.gmra.mxu0 %v438
      %v496 = vpop.f32.mrf.mxu0
      %v497 = vadd.f32 0.0, %v496
      %498 = vdwg.mxu0
      %499 = vmatpush.msra.mxu0 %v305
      %500 = vmatpush.msra.mxu0 %v301
      %501 = vmatpush.msra.mxu0 %v297
      %502 = vmatpush.msra.mxu0 %v293
      %503 = vmatpush.msra.mxu0 %v289
      %504 = vmatpush.msra.mxu0 %v285
      %505 = vmatpush.msra.mxu0 %v281
      %506 = vmatpush.msra.mxu0 %v277
      %507 = vmatpush.msra.mxu0 %v273
      %508 = vmatpush.msra.mxu0 %v269
      %509 = vmatpush.msra.mxu0 %v265
      %510 = vmatpush.msra.mxu0 %v261
      %511 = vmatpush.msra.mxu0 %v257
      %512 = vmatpush.msra.mxu0 %v253
      %513 = vmatpush.msra.mxu0 %v249
      %514 = vmatpush.msra.mxu0 %v245
      %515 = vmatmul.f32.gmra.mxu0 %v438
      %v516 = vpop.f32.mrf.mxu0
      %v517 = vadd.f32 0.0, %v516
      %518 = vdwg.mxu0
      %519 = vmatpush.msra.mxu0 %v237
      %520 = vmatpush.msra.mxu0 %v233
      %521 = vmatpush.msra.mxu0 %v229
      %522 = vmatpush.msra.mxu0 %v225
      %523 = vmatpush.msra.mxu0 %v221
      %524 = vmatpush.msra.mxu0 %v217
      %525 = vmatpush.msra.mxu0 %v213
      %526 = vmatpush.msra.mxu0 %v209
      %527 = vmatpush.msra.mxu0 %v205
      %528 = vmatpush.msra.mxu0 %v201
      %529 = vmatpush.msra.mxu0 %v197
      %530 = vmatpush.msra.mxu0 %v193
      %531 = vmatpush.msra.mxu0 %v189
      %532 = vmatpush.msra.mxu0 %v185
      %533 = vmatpush.msra.mxu0 %v181
      %534 = vmatpush.msra.mxu0 %v177
      %535 = vmatmul.f32.gmra.mxu0 %v436
      %v536 = vpop.f32.mrf.mxu0
      %v537 = vadd.f32 %v457, %v536
      %538 = vdwg.mxu0
      %539 = vmatpush.msra.mxu0 %v238
      %540 = vmatpush.msra.mxu0 %v234
      %541 = vmatpush.msra.mxu0 %v230
      %542 = vmatpush.msra.mxu0 %v226
      %543 = vmatpush.msra.mxu0 %v222
      %544 = vmatpush.msra.mxu0 %v218
      %545 = vmatpush.msra.mxu0 %v214
      %546 = vmatpush.msra.mxu0 %v210
      %547 = vmatpush.msra.mxu0 %v206
      %548 = vmatpush.msra.mxu0 %v202
      %549 = vmatpush.msra.mxu0 %v198
      %550 = vmatpush.msra.mxu0 %v194
      %551 = vmatpush.msra.mxu0 %v190
      %552 = vmatpush.msra.mxu0 %v186
      %553 = vmatpush.msra.mxu0 %v182
      %554 = vmatpush.msra.mxu0 %v178
      %555 = vmatmul.f32.gmra.mxu0 %v436
      %v556 = vpop.f32.mrf.mxu0
      %v557 = vadd.f32 %v477, %v556
      %558 = vdwg.mxu0
      %559 = vmatpush.msra.mxu0 %v239
      %560 = vmatpush.msra.mxu0 %v235
      %561 = vmatpush.msra.mxu0 %v231
      %562 = vmatpush.msra.mxu0 %v227
      %563 = vmatpush.msra.mxu0 %v223
      %564 = vmatpush.msra.mxu0 %v219
      %565 = vmatpush.msra.mxu0 %v215
      %566 = vmatpush.msra.mxu0 %v211
      %567 = vmatpush.msra.mxu0 %v207
      %568 = vmatpush.msra.mxu0 %v203
      %569 = vmatpush.msra.mxu0 %v199
      %570 = vmatpush.msra.mxu0 %v195
      %571 = vmatpush.msra.mxu0 %v191
      %572 = vmatpush.msra.mxu0 %v187
      %573 = vmatpush.msra.mxu0 %v183
      %574 = vmatpush.msra.mxu0 %v179
      %575 = vmatmul.f32.gmra.mxu0 %v436
      %v576 = vpop.f32.mrf.mxu0
      %v577 = vadd.f32 %v497, %v576
      %578 = vdwg.mxu0
      %579 = vmatpush.msra.mxu0 %v240
      %580 = vmatpush.msra.mxu0 %v236
      %581 = vmatpush.msra.mxu0 %v232
      %582 = vmatpush.msra.mxu0 %v228
      %583 = vmatpush.msra.mxu0 %v224
      %584 = vmatpush.msra.mxu0 %v220
      %585 = vmatpush.msra.mxu0 %v216
      %586 = vmatpush.msra.mxu0 %v212
      %587 = vmatpush.msra.mxu0 %v208
      %588 = vmatpush.msra.mxu0 %v204
      %589 = vmatpush.msra.mxu0 %v200
      %590 = vmatpush.msra.mxu0 %v196
      %591 = vmatpush.msra.mxu0 %v192
      %592 = vmatpush.msra.mxu0 %v188
      %593 = vmatpush.msra.mxu0 %v184
      %594 = vmatpush.msra.mxu0 %v180
      %595 = vmatmul.f32.gmra.mxu0 %v436
      %v596 = vpop.f32.mrf.mxu0
      %v597 = vadd.f32 %v517, %v596
      %598 = vdwg.mxu0
      %s599 = scalar_lea.vmem %s167, 16
      %v600 = vld [vmem:[%s599] sm:$0xff]
      %601 = vmatpush.msra.mxu0 %v367
      %602 = vmatpush.msra.mxu0 %v363
      %603 = vmatpush.msra.mxu0 %v359
      %604 = vmatpush.msra.mxu0 %v355
      %605 = vmatpush.msra.mxu0 %v351
      %606 = vmatpush.msra.mxu0 %v347
      %607 = vmatpush.msra.mxu0 %v343
      %608 = vmatpush.msra.mxu0 %v339
      %609 = vmatpush.msra.mxu0 %v335
      %610 = vmatpush.msra.mxu0 %v331
      %611 = vmatpush.msra.mxu0 %v327
      %612 = vmatpush.msra.mxu0 %v323
      %613 = vmatpush.msra.mxu0 %v319
      %614 = vmatpush.msra.mxu0 %v315
      %615 = vmatpush.msra.mxu0 %v311
      %616 = vmatpush.msra.mxu0 %v307
      %617 = vmatmul.f32.gmra.mxu0 %v600
      %v618 = vpop.f32.mrf.mxu0
      %v619 = vadd.f32 0.0, %v618
      %620 = vdwg.mxu0
      %621 = vmatpush.msra.mxu0 %v368
      %622 = vmatpush.msra.mxu0 %v364
      %623 = vmatpush.msra.mxu0 %v360
      %624 = vmatpush.msra.mxu0 %v356
      %625 = vmatpush.msra.mxu0 %v352
      %626 = vmatpush.msra.mxu0 %v348
      %627 = vmatpush.msra.mxu0 %v344
      %628 = vmatpush.msra.mxu0 %v340
      %629 = vmatpush.msra.mxu0 %v336
      %630 = vmatpush.msra.mxu0 %v332
      %631 = vmatpush.msra.mxu0 %v328
      %632 = vmatpush.msra.mxu0 %v324
      %633 = vmatpush.msra.mxu0 %v320
      %634 = vmatpush.msra.mxu0 %v316
      %635 = vmatpush.msra.mxu0 %v312
      %636 = vmatpush.msra.mxu0 %v308
      %637 = vmatmul.f32.gmra.mxu0 %v600
      %v638 = vpop.f32.mrf.mxu0
      %v639 = vadd.f32 0.0, %v638
      %640 = vdwg.mxu0
      %641 = vmatpush.msra.mxu0 %v369
      %642 = vmatpush.msra.mxu0 %v365
      %643 = vmatpush.msra.mxu0 %v361
      %644 = vmatpush.msra.mxu0 %v357
      %645 = vmatpush.msra.mxu0 %v353
      %646 = vmatpush.msra.mxu0 %v349
      %647 = vmatpush.msra.mxu0 %v345
      %648 = vmatpush.msra.mxu0 %v341
      %649 = vmatpush.msra.mxu0 %v337
      %650 = vmatpush.msra.mxu0 %v333
      %651 = vmatpush.msra.mxu0 %v329
      %652 = vmatpush.msra.mxu0 %v325
      %653 = vmatpush.msra.mxu0 %v321
      %654 = vmatpush.msra.mxu0 %v317
      %655 = vmatpush.msra.mxu0 %v313
      %656 = vmatpush.msra.mxu0 %v309
      %657 = vmatmul.f32.gmra.mxu0 %v600
      %v658 = vpop.f32.mrf.mxu0
      %v659 = vadd.f32 0.0, %v658
      %660 = vdwg.mxu0
      %661 = vmatpush.msra.mxu0 %v370
      %662 = vmatpush.msra.mxu0 %v366
      %663 = vmatpush.msra.mxu0 %v362
      %664 = vmatpush.msra.mxu0 %v358
      %665 = vmatpush.msra.mxu0 %v354
      %666 = vmatpush.msra.mxu0 %v350
      %667 = vmatpush.msra.mxu0 %v346
      %668 = vmatpush.msra.mxu0 %v342
      %669 = vmatpush.msra.mxu0 %v338
      %670 = vmatpush.msra.mxu0 %v334
      %671 = vmatpush.msra.mxu0 %v330
      %672 = vmatpush.msra.mxu0 %v326
      %673 = vmatpush.msra.mxu0 %v322
      %674 = vmatpush.msra.mxu0 %v318
      %675 = vmatpush.msra.mxu0 %v314
      %676 = vmatpush.msra.mxu0 %v310
      %677 = vmatmul.f32.gmra.mxu0 %v600
      %v678 = vpop.f32.mrf.mxu0
      %v679 = vadd.f32 0.0, %v678
      %680 = vdwg.mxu0
      %v681 = vadd.f32 %v537, %v619
      %v682 = vadd.f32 %v557, %v639
      %v683 = vadd.f32 %v577, %v659
      %v684 = vadd.f32 %v597, %v679
      %s685 = scalar_lea.vmem %s167, 24
      %v686 = vld [vmem:[%s685] sm:$0xff]
      %687 = vmatpush.msra.mxu0 %v432
      %688 = vmatpush.msra.mxu0 %v428
      %689 = vmatpush.msra.mxu0 %v424
      %690 = vmatpush.msra.mxu0 %v420
      %691 = vmatpush.msra.mxu0 %v416
      %692 = vmatpush.msra.mxu0 %v412
      %693 = vmatpush.msra.mxu0 %v408
      %694 = vmatpush.msra.mxu0 %v404
      %695 = vmatpush.msra.mxu0 %v400
      %696 = vmatpush.msra.mxu0 %v396
      %697 = vmatpush.msra.mxu0 %v392
      %698 = vmatpush.msra.mxu0 %v388
      %699 = vmatpush.msra.mxu0 %v384
      %700 = vmatpush.msra.mxu0 %v380
      %701 = vmatpush.msra.mxu0 %v376
      %702 = vmatpush.msra.mxu0 %v372
      %703 = vmatmul.f32.gmra.mxu0 %v686
      %v704 = vpop.f32.mrf.mxu0
      %v705 = vadd.f32 0.0, %v704
      %706 = vdwg.mxu0
      %707 = vmatpush.msra.mxu0 %v433
      %708 = vmatpush.msra.mxu0 %v429
      %709 = vmatpush.msra.mxu0 %v425
      %710 = vmatpush.msra.mxu0 %v421
      %711 = vmatpush.msra.mxu0 %v417
      %712 = vmatpush.msra.mxu0 %v413
      %713 = vmatpush.msra.mxu0 %v409
      %714 = vmatpush.msra.mxu0 %v405
      %715 = vmatpush.msra.mxu0 %v401
      %716 = vmatpush.msra.mxu0 %v397
      %717 = vmatpush.msra.mxu0 %v393
      %718 = vmatpush.msra.mxu0 %v389
      %719 = vmatpush.msra.mxu0 %v385
      %720 = vmatpush.msra.mxu0 %v381
      %721 = vmatpush.msra.mxu0 %v377
      %722 = vmatpush.msra.mxu0 %v373
      %723 = vmatmul.f32.gmra.mxu0 %v686
      %v724 = vpop.f32.mrf.mxu0
      %v725 = vadd.f32 0.0, %v724
      %726 = vdwg.mxu0
      %727 = vmatpush.msra.mxu0 %v434
      %728 = vmatpush.msra.mxu0 %v430
      %729 = vmatpush.msra.mxu0 %v426
      %730 = vmatpush.msra.mxu0 %v422
      %731 = vmatpush.msra.mxu0 %v418
      %732 = vmatpush.msra.mxu0 %v414
      %733 = vmatpush.msra.mxu0 %v410
      %734 = vmatpush.msra.mxu0 %v406
      %735 = vmatpush.msra.mxu0 %v402
      %736 = vmatpush.msra.mxu0 %v398
      %737 = vmatpush.msra.mxu0 %v394
      %738 = vmatpush.msra.mxu0 %v390
      %739 = vmatpush.msra.mxu0 %v386
      %740 = vmatpush.msra.mxu0 %v382
      %741 = vmatpush.msra.mxu0 %v378
      %742 = vmatpush.msra.mxu0 %v374
      %743 = vmatmul.f32.gmra.mxu0 %v686
      %v744 = vpop.f32.mrf.mxu0
      %v745 = vadd.f32 0.0, %v744
      %746 = vdwg.mxu0
      %747 = vmatpush.msra.mxu0 %v435
      %748 = vmatpush.msra.mxu0 %v431
      %749 = vmatpush.msra.mxu0 %v427
      %750 = vmatpush.msra.mxu0 %v423
      %751 = vmatpush.msra.mxu0 %v419
      %752 = vmatpush.msra.mxu0 %v415
      %753 = vmatpush.msra.mxu0 %v411
      %754 = vmatpush.msra.mxu0 %v407
      %755 = vmatpush.msra.mxu0 %v403
      %756 = vmatpush.msra.mxu0 %v399
      %757 = vmatpush.msra.mxu0 %v395
      %758 = vmatpush.msra.mxu0 %v391
      %759 = vmatpush.msra.mxu0 %v387
      %760 = vmatpush.msra.mxu0 %v383
      %761 = vmatpush.msra.mxu0 %v379
      %762 = vmatpush.msra.mxu0 %v375
      %763 = vmatmul.f32.gmra.mxu0 %v686
      %v764 = vpop.f32.mrf.mxu0
      %v765 = vadd.f32 0.0, %v764
      %766 = vdwg.mxu0
      %v767 = vadd.f32 %v681, %v705
      %v768 = vadd.f32 %v682, %v725
      %v769 = vadd.f32 %v683, %v745
      %v770 = vadd.f32 %v684, %v765
      %771 = vst [vmem:[%s176] sm:$0xff] %v767
      %772 = vst [vmem:[%s176 + $0x8] sm:$0xff] %v768
      %773 = vst [vmem:[%s176 + $0x10] sm:$0xff] %v769
      %774 = vst [vmem:[%s176 + $0x18] sm:$0xff] %v770
      %p775 = scmp.lt.s32.totalorder %s17, 1
      %s776 = scalar_select %p775, %s17, 1
      %p777 = scmp.lt.s32.totalorder %s18, 0
      %s778 = scalar_select %p777, %s18, 0
      %s779 = smul.addr %s778, 4
      %s780 = smul.addr %s776, 4
      %s781 = sadd.s32 %s779, %s780
      %s782 = smul.addr %s781, 8
      %s783 = scalar_lea.vmem %s2, %s782
      // Predicated region
      $region29: #{inverse_haar_transform.1} parent=27 // pred_check
        %p784 = pneg %p94
      $region30: #{inverse_haar_transform.1} parent=27 // pred_check_branch
        %786 = sbr.rel (%p784) target = $region32
      $region31: #{inverse_haar_transform.1} parent=27 // pred_region
        _
      $region32: #{inverse_haar_transform.1} parent=27 // pred_fallthru
        _
    $region28: #{inverse_haar_transform.1} parent=5 // pred_fallthru
      _
    %p787 = scmp.le.s32.totalorder 2, %s8
    // Predicated region
    $region33: #{inverse_haar_transform.1} parent=5 // pred_check
      %p788 = pneg %p787
    $region34: #{inverse_haar_transform.1} parent=5 // pred_check_branch
      %790 = sbr.rel (%p788) target = $region36
    $region35: #{inverse_haar_transform.1} parent=5 // pred_region
      %s791 = ssub.s32 %s8, 2
      // Predicated region
      $region37: #{inverse_haar_transform.1} parent=35 // pred_check
        %p792 = pneg %p100
      $region38: #{inverse_haar_transform.1} parent=35 // pred_check_branch
        %794 = sbr.rel (%p792) target = $region40
      $region39: #{inverse_haar_transform.1} parent=35 // pred_region
        %p795 = scmp.lt.s32.totalorder %s19, 1
        %s796 = scalar_select %p795, %s19, 1
        %p797 = scmp.lt.s32.totalorder %s20, 0
        %s798 = scalar_select %p797, %s20, 0
        %s799 = smul.addr %s798, 4
        %s800 = smul.addr %s796, 4
        %s801 = sadd.s32 %s799, %s800
        %s802 = smul.addr %s801, 8
        %s803 = scalar_lea.vmem %s2, %s802
      $region40: #{inverse_haar_transform.1} parent=35 // pred_fallthru
        _
    $region36: #{inverse_haar_transform.1} parent=5 // pred_fallthru
      _
  $region6: #{inverse_haar_transform.1} parent=0 // loop_footer
    %s12 = sadd.s32 1, %s8
  $region7: #{inverse_haar_transform.1} parent=0 // loop_footer_branch
    %7 = sbr.rel target = $region3
  $region8: #{inverse_haar_transform.1} parent=0 // loop_exit
    _

</llo_original>
